<compile_context>
chip_gen: v7x
topology: tpu7x:2x2x1
jax: 0.10.0
libtpu: 0.0.40
codegen_flags: <defaults>
</compile_context>

<pallas_src>
import math

import jax
import jax.numpy as jnp
from jax.experimental import pallas as pl
from jax.experimental.pallas import tpu as pltpu


# ---------------------------------------------------------------------------
# Kernel: per-channel affine on a lane-dense (bn, bl) tile.
# scale/bias are (1, bl) f32 rows broadcast over the sublane (batch) axis.
# ---------------------------------------------------------------------------
def _affine_kernel(x_ref, scale_ref, bias_ref, o_ref):
    x = x_ref[...].astype(jnp.float32)
    o_ref[...] = (x * scale_ref[...] + bias_ref[...]).astype(o_ref.dtype)


_MAX_LANE_TILE = 32768       # lane-axis tile cap (multiple of 128)
_MAX_BATCH_TILE = 512        # sublane-axis tile cap
_TARGET_TILE_BYTES = 4 * 1024 * 1024   # ~4 MiB per data buffer
_VMEM_LIMIT_BYTES = 48 * 1024 * 1024   # fits v7x 64 MiB physical with headroom


def _pick_tiles(n, chw, dtype):
    itemsize = jnp.dtype(dtype).itemsize
    pack = 8 * max(1, 4 // itemsize)          # 8 f32, 16 bf16, 32 int8/fp8

    # Lane tile: 128-aligned (or the full dim when it is tiny).
    if chw <= 128:
        bl = chw
    else:
        bl = min((chw // 128) * 128, _MAX_LANE_TILE)

    # Batch tile: multiple of the sublane packing factor, sized so one data
    # buffer is ~_TARGET_TILE_BYTES, capped at _MAX_BATCH_TILE and n.
    bn_target = max(pack, _TARGET_TILE_BYTES // max(1, bl * itemsize))
    bn = min(n, _MAX_BATCH_TILE, bn_target)
    if bn >= pack:
        bn = (bn // pack) * pack

    # v7x has 2 TensorCores: when the whole problem would be a single grid
    # step but the batch tile is splittable, halve it so both cores get work.
    if pl.cdiv(n, bn) * pl.cdiv(chw, bl) < 2 and bn > pack:
        bn = max(pack, ((bn // 2) // pack) * pack)

    return bn, bl


def _channelwise_affine(x, scale_c, bias_c):
    """y[:, c, ...] = x[:, c, ...] * scale_c[c] + bias_c[c]  (lane-dense Pallas)."""
    orig_shape = x.shape
    n, c = orig_shape[0], orig_shape[1]
    hw = int(math.prod(orig_shape[2:])) if len(orig_shape) > 2 else 1
    chw = c * hw

    # Lane-dense layout: channel + spatial collapsed onto the last (lane) axis.
    x2d = x.reshape(n, chw)

    # Per-channel stats expanded to single lane-dense f32 rows (1, C*H*W).
    scale_row = jnp.repeat(scale_c.astype(jnp.float32), hw).reshape(1, chw)
    bias_row = jnp.repeat(bias_c.astype(jnp.float32), hw).reshape(1, chw)

    bn, bl = _pick_tiles(n, chw, x.dtype)
    # Lane axis OUTER, batch axis inner: the stats rows' block index depends
    # only on the outer index, so Pallas skips re-copying them across the
    # inner batch steps.
    grid = (pl.cdiv(chw, bl), pl.cdiv(n, bn))

    itemsize = jnp.dtype(x.dtype).itemsize
    cost = pl.CostEstimate(
        flops=2 * n * chw,
        transcendentals=0,
        bytes_accessed=int(2 * n * chw * itemsize + 2 * chw * 4),
    )

    out2d = pl.pallas_call(
        _affine_kernel,
        out_shape=jax.ShapeDtypeStruct((n, chw), x.dtype),
        grid=grid,
        in_specs=[
            pl.BlockSpec((bn, bl), lambda j, i: (i, j)),   # x tile
            pl.BlockSpec((1, bl), lambda j, i: (0, j)),    # scale row tile
            pl.BlockSpec((1, bl), lambda j, i: (0, j)),    # bias row tile
        ],
        out_specs=pl.BlockSpec((bn, bl), lambda j, i: (i, j)),
        compiler_params=pltpu.CompilerParams(
            dimension_semantics=("parallel", "parallel"),
            vmem_limit_bytes=_VMEM_LIMIT_BYTES,
        ),
        cost_estimate=cost,
    )(x2d, scale_row, bias_row)

    return out2d.reshape(orig_shape)


def _pad_scale_bias(scale, bias, c):
    """Pad per-channel (scale, bias) to length C with identity (1, 0) so
    channels beyond len(stats) pass through unchanged, matching the PyTorch
    loop over range(len(stats))."""
    k = scale.shape[0]
    if k < c:
        scale = jnp.concatenate([scale, jnp.ones((c - k,), scale.dtype)])
        bias = jnp.concatenate([bias, jnp.zeros((c - k,), bias.dtype)])
    return scale[:c], bias[:c]


def series_encode_pallas(x, mean_input, std_input):
    c = x.shape[1]
    mi = jnp.asarray(mean_input, jnp.float32).reshape(-1)
    si = jnp.asarray(std_input, jnp.float32).reshape(-1)
    s, b = _pad_scale_bias(1.0 / si, -mi / si, c)
    return _channelwise_affine(x, s, b)


def series_decode_pallas(x, mean_output, std_output):
    c = x.shape[1]
    mo = jnp.asarray(mean_output, jnp.float32).reshape(-1)
    so = jnp.asarray(std_output, jnp.float32).reshape(-1)
    s, b = _pad_scale_bias(so, mo, c)
    return _channelwise_affine(x, s, b)


class DeployPallas:
    """Pallas port of `deploy`: series_encode -> model -> series_decode."""

    def __init__(self, model, mean_input, mean_output, std_input, std_output):
        # TODO(synk): the wrapped `model` is an arbitrary torch module in the
        # spec; here it must be a JAX callable — None means identity (fused).
        self.model = model

        mi = jnp.asarray(mean_input, jnp.float32).reshape(-1)
        si = jnp.asarray(std_input, jnp.float32).reshape(-1)
        mo = jnp.asarray(mean_output, jnp.float32).reshape(-1)
        so = jnp.asarray(std_output, jnp.float32).reshape(-1)

        # Host-side O(C) FMA fold: no per-element divide in the kernel.
        self._enc_scale, self._enc_bias = 1.0 / si, -mi / si
        self._dec_scale, self._dec_bias = so, mo

        if model is None:
            # Identity model: single fused pallas_call (2 HBM passes, not 4).
            self._forward = jax.jit(self._fused_forward)
        else:
            self._encode = jax.jit(self._encode_fn)
            self._decode = jax.jit(self._decode_fn)
            self._forward = self._unfused_forward

    # ---- forward variants -------------------------------------------------
    def _fused_forward(self, x):
        c = x.shape[1]
        es, eb = _pad_scale_bias(self._enc_scale, self._enc_bias, c)
        ds, db = _pad_scale_bias(self._dec_scale, self._dec_bias, c)
        # decode(encode(x)) per channel: x*(es*ds) + (eb*ds + db)
        return _channelwise_affine(x, es * ds, eb * ds + db)

    def _encode_fn(self, x):
        c = x.shape[1]
        s, b = _pad_scale_bias(self._enc_scale, self._enc_bias, c)
        return _channelwise_affine(x, s, b)

    def _decode_fn(self, x):
        c = x.shape[1]
        s, b = _pad_scale_bias(self._dec_scale, self._dec_bias, c)
        return _channelwise_affine(x, s, b)

    def _unfused_forward(self, x):
        x = self._encode(x)
        x = self.model(x)
        x = self._decode(x)
        return x

    def __call__(self, x):
        return self._forward(x)


if __name__ == "__main__":
    key = jax.random.PRNGKey(0)
    x = jax.random.normal(key, (2, 4, 16, 16), dtype=jnp.float32)  # NCHW

    mean_input = jnp.array([0.5, -1.0, 2.0, 0.25], dtype=jnp.float32)
    std_input = jnp.array([1.5, 0.5, 2.0, 1.0], dtype=jnp.float32)
    mean_output = jnp.array([-0.3, 0.7, 1.0, 0.0], dtype=jnp.float32)
    std_output = jnp.array([2.0, 0.25, 1.5, 3.0], dtype=jnp.float32)

    mi = mean_input.reshape(1, -1, 1, 1)
    si = std_input.reshape(1, -1, 1, 1)
    mo = mean_output.reshape(1, -1, 1, 1)
    so = std_output.reshape(1, -1, 1, 1)

    # 1) Identity-model path (fully fused single pallas_call).
    deploy_id = DeployPallas(None, mean_input, mean_output, std_input, std_output)
    out_id = jax.block_until_ready(deploy_id(x))
    ref_id = ((x - mi) / si) * so + mo
    assert out_id.shape == ref_id.shape and out_id.dtype == ref_id.dtype
    assert bool(jnp.allclose(out_id, ref_id, rtol=1e-5, atol=1e-5)), "fused mismatch"

    # 2) Non-identity model path (separate encode / decode pallas_calls).
    model_fn = lambda y: jnp.tanh(y)
    deploy_m = DeployPallas(model_fn, mean_input, mean_output, std_input, std_output)
    out_m = jax.block_until_ready(deploy_m(x))
    ref_m = jnp.tanh((x - mi) / si) * so + mo
    assert out_m.shape == ref_m.shape and out_m.dtype == ref_m.dtype
    assert bool(jnp.allclose(out_m, ref_m, rtol=1e-5, atol=1e-5)), "unfused mismatch"

    print("KERNEL_OK")
</pallas_src>

<mosaic_0001>
module attributes {stable_mosaic.version = 11 : i64} {
  func.func @_affine_kernel(%arg0: i32, %arg1: i32, %arg2: memref<2x1024xf32, #tpu.memory_space<vmem>>, %arg3: memref<1x1024xf32, #tpu.memory_space<vmem>>, %arg4: memref<1x1024xf32, #tpu.memory_space<vmem>>, %arg5: memref<2x1024xf32, #tpu.memory_space<vmem>>) attributes {dimension_semantics = [#tpu.dimension_semantics<parallel>, #tpu.dimension_semantics<parallel>], iteration_bounds = array<i64: 1, 1>, scalar_prefetch = 0 : i64, scratch_operands = 0 : i64, tpu.core_type = #tpu.core_type<tc>, window_params = [{transform_indices = @transform_0, window_bounds = array<i64: 2, 1024>}, {transform_indices = @transform_1, window_bounds = array<i64: 1, 1024>}, {transform_indices = @transform_2, window_bounds = array<i64: 1, 1024>}, {transform_indices = @transform_3, window_bounds = array<i64: 2, 1024>}]} {
    %c0 = arith.constant 0 : index
    %c0_0 = arith.constant 0 : index
    %0 = vector.load %arg2[%c0, %c0_0] : memref<2x1024xf32, #tpu.memory_space<vmem>>, vector<2x1024xf32>
    %c0_1 = arith.constant 0 : index
    %c0_2 = arith.constant 0 : index
    %1 = vector.load %arg3[%c0_1, %c0_2] : memref<1x1024xf32, #tpu.memory_space<vmem>>, vector<1x1024xf32>
    %2 = vector.broadcast %1 : vector<1x1024xf32> to vector<2x1024xf32>
    %3 = arith.mulf %0, %2 : vector<2x1024xf32>
    %c0_3 = arith.constant 0 : index
    %c0_4 = arith.constant 0 : index
    %4 = vector.load %arg4[%c0_3, %c0_4] : memref<1x1024xf32, #tpu.memory_space<vmem>>, vector<1x1024xf32>
    %5 = vector.broadcast %4 : vector<1x1024xf32> to vector<2x1024xf32>
    %6 = arith.addf %3, %5 : vector<2x1024xf32>
    %c0_5 = arith.constant 0 : index
    %c0_6 = arith.constant 0 : index
    %7 = vector.load %arg5[%c0_5, %c0_6] : memref<2x1024xf32, #tpu.memory_space<vmem>>, vector<2x1024xf32>
    tpu.vector_store %arg5[%c0_5, %c0_6], %6 {strides = array<i32>} : memref<2x1024xf32, #tpu.memory_space<vmem>>, vector<2x1024xf32>,
    return
  }
  func.func @transform_0(%arg0: i32, %arg1: i32) -> (i32, i32) {
    %c0_i32 = arith.constant 0 : i32
    return %arg1, %arg0 : i32, i32
  }
  func.func @transform_1(%arg0: i32, %arg1: i32) -> (i32, i32) {
    %c0_i32 = arith.constant 0 : i32
    %c0_i32_0 = arith.constant 0 : i32
    return %c0_i32, %arg0 : i32, i32
  }
  func.func @transform_2(%arg0: i32, %arg1: i32) -> (i32, i32) {
    %c0_i32 = arith.constant 0 : i32
    %c0_i32_0 = arith.constant 0 : i32
    return %c0_i32, %arg0 : i32, i32
  }
  func.func @transform_3(%arg0: i32, %arg1: i32) -> (i32, i32) {
    %c0_i32 = arith.constant 0 : i32
    return %arg1, %arg0 : i32, i32
  }
}

</mosaic_0001>

<llo_original>
// kernel: _fused_forward.1
$region0: #{_fused_forward.1}
  #allocation0 [shape = 'u32[]', space=smem, size = 0x4, offset = 0x4, fixed_abs, tag = 'smem constant byte address 0x4 - core index']
  #allocation1 [shape = 'u32[144,128]{1,0:T(1,128)}', space=vmem, size = 0x12000, scoped, tag = 'internal scratch']
  %s0 = inlined_call_operand.vmem [shape: f32[2,1024], index: 0, kind: input, shape index: {}]
  %s1 = inlined_call_operand.vmem [shape: f32[1,1024], index: 1, kind: input, shape index: {}]
  %s2 = inlined_call_operand.vmem [shape: f32[1,1024], index: 2, kind: input, shape index: {}]
  %s3 = inlined_call_operand.vmem [shape: f32[2,1024], index: 3, kind: output, shape index: {}]
  %s4 = sld [smem:[#allocation0]]
  $region22: #{_fused_forward.1} parent=0
    _
  %s6 = ssub.s32 1, %s4
  %s7 = scalar_select 0, %s6, %s4
  // Predicated region
  $region2: #{_fused_forward.1} parent=0 // pred_check
    _
  $region3: #{_fused_forward.1} parent=0 // pred_check_branch
    %9 = sbr.rel (0) target = $region5
  $region4: #{_fused_forward.1} parent=0 // pred_region
    _
  $region5: #{_fused_forward.1} parent=0 // pred_fallthru
    _
  // Predicated region
  $region6: #{_fused_forward.1} parent=0 // pred_check
    _
  $region7: #{_fused_forward.1} parent=0 // pred_check_branch
    %11 = sbr.rel (0) target = $region9
  $region8: #{_fused_forward.1} parent=0 // pred_region
    _
  $region9: #{_fused_forward.1} parent=0 // pred_fallthru
    _
  // Predicated region
  $region10: #{_fused_forward.1} parent=0 // pred_check
    _
  $region11: #{_fused_forward.1} parent=0 // pred_check_branch
    %13 = sbr.rel (0) target = $region13
  $region12: #{_fused_forward.1} parent=0 // pred_region
    _
  $region13: #{_fused_forward.1} parent=0 // pred_fallthru
    _
  %v14 = vld [vmem:[%s0] sm:$0xff]
  %v15 = vld [vmem:[%s0 + $0x8] sm:$0xff]
  %v16 = vld [vmem:[%s1] sm:$0xff]
  %v18 = vlaneseq
  %v19 = vshrl.u32 %v18, 7
  %v20 = vsub.s32 0, %v19
  %v21 = vrot.slane %v16, %v20
  %v22 = vlaneseq
  %v23 = vshrl.u32 %v22, 7
  %v24 = vsub.s32 1, %v23
  %v25 = vrot.slane %v16, %v24
  %v26 = vlaneseq
  %v27 = vshrl.u32 %v26, 7
  %v28 = vsub.s32 2, %v27
  %v29 = vrot.slane %v16, %v28
  %v30 = vlaneseq
  %v31 = vshrl.u32 %v30, 7
  %v32 = vsub.s32 3, %v31
  %v33 = vrot.slane %v16, %v32
  %v34 = vlaneseq
  %v35 = vshrl.u32 %v34, 7
  %v36 = vsub.s32 4, %v35
  %v37 = vrot.slane %v16, %v36
  %v38 = vlaneseq
  %v39 = vshrl.u32 %v38, 7
  %v40 = vsub.s32 5, %v39
  %v41 = vrot.slane %v16, %v40
  %v42 = vlaneseq
  %v43 = vshrl.u32 %v42, 7
  %v44 = vsub.s32 6, %v43
  %v45 = vrot.slane %v16, %v44
  %v46 = vlaneseq
  %v47 = vshrl.u32 %v46, 7
  %v48 = vsub.s32 7, %v47
  %v49 = vrot.slane %v16, %v48
  %v50 = vcombine.low %v21, %v25
  %v51 = vcombine.low %v29, %v33
  %v53 = vunpack.c.l.s4 1983009808
  %v54 = vunpack.c.0.s8 %v53
  %v55 = vlaneseq
  %v56 = vshrl.u32 %v55, 7
  %v57 = vsub.s32 %v54, %v56
  %v58 = vrot.slane %v50, %v57
  %v60 = vunpack.c.l.s4 1983009808
  %v61 = vunpack.c.0.s8 %v60
  %v62 = vlaneseq
  %v63 = vshrl.u32 %v62, 7
  %v64 = vsub.s32 %v61, %v63
  %v65 = vrot.slane %v51, %v64
  %v66 = vcombine.low %v58, %v65
  %v67 = vcombine.low %v37, %v41
  %v68 = vcombine.low %v45, %v49
  %v70 = vunpack.c.l.s4 1983009808
  %v71 = vunpack.c.0.s8 %v70
  %v72 = vlaneseq
  %v73 = vshrl.u32 %v72, 7
  %v74 = vsub.s32 %v71, %v73
  %v75 = vrot.slane %v67, %v74
  %v77 = vunpack.c.l.s4 1983009808
  %v78 = vunpack.c.0.s8 %v77
  %v79 = vlaneseq
  %v80 = vshrl.u32 %v79, 7
  %v81 = vsub.s32 %v78, %v80
  %v82 = vrot.slane %v68, %v81
  %v83 = vcombine.low %v75, %v82
  %v86 = vmul.f32 %v14, %v66
  %v87 = vmul.f32 %v15, %v83
  %v88 = vld [vmem:[%s2] sm:$0xff]
  %v90 = vlaneseq
  %v91 = vshrl.u32 %v90, 7
  %v92 = vsub.s32 0, %v91
  %v93 = vrot.slane %v88, %v92
  %v94 = vlaneseq
  %v95 = vshrl.u32 %v94, 7
  %v96 = vsub.s32 1, %v95
  %v97 = vrot.slane %v88, %v96
  %v98 = vlaneseq
  %v99 = vshrl.u32 %v98, 7
  %v100 = vsub.s32 2, %v99
  %v101 = vrot.slane %v88, %v100
  %v102 = vlaneseq
  %v103 = vshrl.u32 %v102, 7
  %v104 = vsub.s32 3, %v103
  %v105 = vrot.slane %v88, %v104
  %v106 = vlaneseq
  %v107 = vshrl.u32 %v106, 7
  %v108 = vsub.s32 4, %v107
  %v109 = vrot.slane %v88, %v108
  %v110 = vlaneseq
  %v111 = vshrl.u32 %v110, 7
  %v112 = vsub.s32 5, %v111
  %v113 = vrot.slane %v88, %v112
  %v114 = vlaneseq
  %v115 = vshrl.u32 %v114, 7
  %v116 = vsub.s32 6, %v115
  %v117 = vrot.slane %v88, %v116
  %v118 = vlaneseq
  %v119 = vshrl.u32 %v118, 7
  %v120 = vsub.s32 7, %v119
  %v121 = vrot.slane %v88, %v120
  %v122 = vcombine.low %v93, %v97
  %v123 = vcombine.low %v101, %v105
  %v125 = vunpack.c.l.s4 1983009808
  %v126 = vunpack.c.0.s8 %v125
  %v127 = vlaneseq
  %v128 = vshrl.u32 %v127, 7
  %v129 = vsub.s32 %v126, %v128
  %v130 = vrot.slane %v122, %v129
  %v132 = vunpack.c.l.s4 1983009808
  %v133 = vunpack.c.0.s8 %v132
  %v134 = vlaneseq
  %v135 = vshrl.u32 %v134, 7
  %v136 = vsub.s32 %v133, %v135
  %v137 = vrot.slane %v123, %v136
  %v138 = vcombine.low %v130, %v137
  %v139 = vcombine.low %v109, %v113
  %v140 = vcombine.low %v117, %v121
  %v142 = vunpack.c.l.s4 1983009808
  %v143 = vunpack.c.0.s8 %v142
  %v144 = vlaneseq
  %v145 = vshrl.u32 %v144, 7
  %v146 = vsub.s32 %v143, %v145
  %v147 = vrot.slane %v139, %v146
  %v149 = vunpack.c.l.s4 1983009808
  %v150 = vunpack.c.0.s8 %v149
  %v151 = vlaneseq
  %v152 = vshrl.u32 %v151, 7
  %v153 = vsub.s32 %v150, %v152
  %v154 = vrot.slane %v140, %v153
  %v155 = vcombine.low %v147, %v154
  %v158 = vadd.f32 %v86, %v138
  %v159 = vadd.f32 %v87, %v155
  %160 = vst [vmem:[%s3] sm:$0xff] %v158
  %161 = vst [vmem:[%s3 + $0x8] sm:$0xff] %v159
  // Predicated region
  $region14: #{_fused_forward.1} parent=0 // pred_check
    _
  $region15: #{_fused_forward.1} parent=0 // pred_check_branch
    %163 = sbr.rel (0) target = $region17
  $region16: #{_fused_forward.1} parent=0 // pred_region
    _
  $region17: #{_fused_forward.1} parent=0 // pred_fallthru
    _
  // Predicated region
  $region18: #{_fused_forward.1} parent=0 // pred_check
    _
  $region19: #{_fused_forward.1} parent=0 // pred_check_branch
    %165 = sbr.rel (0) target = $region21
  $region20: #{_fused_forward.1} parent=0 // pred_region
    _
  $region21: #{_fused_forward.1} parent=0 // pred_fallthru
    _

</llo_original>
